<compile_context>
chip_gen: v6e
topology: v6e:2x2x1
jax: 0.10.0
libtpu: 0.0.40
codegen_flags: <defaults>
</compile_context>

<pallas_src>
import functools

import jax
import jax.numpy as jnp
from jax.experimental import pallas as pl
from jax.experimental.pallas import tpu as pltpu

BN_EPS = 1e-5


def _round_up(x, m):
    return (x + m - 1) // m * m


def mlp_bn_pre_kernel(n_real,
                      x_ref, w_in_ref, w_h_ref, gamma_ref, beta_ref,
                      w_out_ref, b_out_ref, mask_ref, o_ref, h_ref):
    """Grid axis 0 = layer index: step 0 is fc_in, steps 1..L are hidden
    layers, the last step additionally runs fc_out.  h_ref is a persistent
    f32 VMEM scratch carrying the activation between grid steps."""
    l = pl.program_id(0)
    last = pl.num_programs(0) - 1

    gamma = gamma_ref[...]        # (1, Hp) f32
    beta = beta_ref[...]          # (1, Hp) f32
    row_mask = mask_ref[...]      # (Np, 1) f32: 1 for real batch rows, 0 for pad
    inv_n = jnp.float32(1.0 / n_real)

    def bn_relu(h):
        # One-pass batch statistics (padded rows are exactly zero, so sums
        # only see the real N rows; divide by the real N).
        s1 = jnp.sum(h, axis=0, keepdims=True)
        s2 = jnp.sum(h * h, axis=0, keepdims=True)
        mean = s1 * inv_n
        var = jnp.maximum(s2 * inv_n - mean * mean, 0.0)
        # Fold normalize + affine into one per-feature scale/shift (rsqrt -> EUP).
        scale = gamma * jax.lax.rsqrt(var + BN_EPS)
        shift = beta - mean * scale
        # Mask padded batch rows back to zero so later layers' stats stay exact.
        return jnp.maximum(h * scale + shift, 0.0) * row_mask

    @pl.when(l == 0)
    def _():
        h = jnp.dot(x_ref[...], w_in_ref[...],
                    preferred_element_type=jnp.float32)
        h_ref[...] = bn_relu(h)

    @pl.when(l > 0)
    def _():
        h = jnp.dot(h_ref[...].astype(jnp.bfloat16), w_h_ref[0],
                    preferred_element_type=jnp.float32)
        h_ref[...] = bn_relu(h)

    @pl.when(l == last)
    def _():
        out = jnp.dot(h_ref[...].astype(jnp.bfloat16), w_out_ref[...],
                      preferred_element_type=jnp.float32)
        o_ref[...] = out + b_out_ref[...]


def mlp_bn_pre_forward(x, w_in_t, w_h_t, gamma, beta, w_out_t, b_out):
    """x: (N, input_dim).  Linear weights pre-transposed to (in, out)."""
    n, in_dim = x.shape
    hidden = int(w_in_t.shape[1])
    out_dim = int(w_out_t.shape[1])
    num_layers = int(w_h_t.shape[0])

    # Lane/sublane-friendly padded shapes.
    n_pad = _round_up(n, 16)          # bf16 sublane packing
    in_pad = _round_up(in_dim, 128)
    h_pad = _round_up(hidden, 128)
    out_pad = _round_up(out_dim, 128)  # lane-dense output store

    bf16 = jnp.bfloat16
    x_p = jnp.zeros((n_pad, in_pad), bf16).at[:n, :in_dim].set(x.astype(bf16))
    w_in_p = jnp.zeros((in_pad, h_pad), bf16).at[:in_dim, :hidden].set(
        w_in_t.astype(bf16))
    n_wh = max(num_layers, 1)
    w_h_p = jnp.zeros((n_wh, h_pad, h_pad), bf16)
    if num_layers > 0:
        w_h_p = w_h_p.at[:, :hidden, :hidden].set(w_h_t.astype(bf16))
    w_out_p = jnp.zeros((h_pad, out_pad), bf16).at[:hidden, :out_dim].set(
        w_out_t.astype(bf16))
    gamma_p = jnp.ones((1, h_pad), jnp.float32).at[:, :hidden].set(gamma)
    beta_p = jnp.zeros((1, h_pad), jnp.float32).at[:, :hidden].set(beta)
    b_out_p = jnp.zeros((1, out_pad), jnp.float32).at[:, :out_dim].set(b_out)
    row_mask = (jnp.arange(n_pad) < n).astype(jnp.float32).reshape(n_pad, 1)

    def _nbytes(a):
        return int(a.size) * a.dtype.itemsize

    out_bytes = n_pad * out_pad * 4
    # Resident set: double-buffered inputs (only ONE (Hp,Hp) weight tile,
    # the layer stack is streamed), output block and the f32 h scratch.
    resident = (2 * (_nbytes(x_p) + _nbytes(w_in_p)
                     + h_pad * h_pad * 2
                     + _nbytes(gamma_p) + _nbytes(beta_p)
                     + _nbytes(w_out_p) + _nbytes(b_out_p) + _nbytes(row_mask))
                + 2 * out_bytes
                + n_pad * h_pad * 4)
    vmem_limit = int(min(max(2 * resident, 16 << 20), 64 << 20))

    flops = 2 * n_pad * (in_pad * h_pad
                         + num_layers * h_pad * h_pad
                         + h_pad * out_pad)
    transcendentals = (num_layers + 1) * h_pad
    bytes_accessed = (_nbytes(x_p) + _nbytes(w_in_p) + _nbytes(w_h_p)
                      + _nbytes(gamma_p) + _nbytes(beta_p) + _nbytes(w_out_p)
                      + _nbytes(b_out_p) + _nbytes(row_mask) + out_bytes)

    out_p = pl.pallas_call(
        functools.partial(mlp_bn_pre_kernel, n),
        out_shape=jax.ShapeDtypeStruct((n_pad, out_pad), jnp.float32),
        grid_spec=pltpu.PrefetchScalarGridSpec(
            num_scalar_prefetch=0,
            grid=(num_layers + 1,),
            in_specs=[
                pl.BlockSpec((n_pad, in_pad), lambda l: (0, 0)),
                pl.BlockSpec((in_pad, h_pad), lambda l: (0, 0)),
                # Stream one hidden-layer weight tile per grid step.
                pl.BlockSpec((1, h_pad, h_pad),
                             lambda l: (jnp.maximum(l - 1, 0), 0, 0)),
                pl.BlockSpec((1, h_pad), lambda l: (0, 0)),
                pl.BlockSpec((1, h_pad), lambda l: (0, 0)),
                pl.BlockSpec((h_pad, out_pad), lambda l: (0, 0)),
                pl.BlockSpec((1, out_pad), lambda l: (0, 0)),
                pl.BlockSpec((n_pad, 1), lambda l: (0, 0)),
            ],
            out_specs=pl.BlockSpec((n_pad, out_pad), lambda l: (0, 0)),
            scratch_shapes=[pltpu.VMEM((n_pad, h_pad), jnp.float32)],
        ),
        compiler_params=pltpu.CompilerParams(
            dimension_semantics=("arbitrary",),
            vmem_limit_bytes=vmem_limit,
        ),
        cost_estimate=pl.CostEstimate(
            flops=int(flops),
            transcendentals=int(transcendentals),
            bytes_accessed=int(bytes_accessed)),
    )(x_p, w_in_p, w_h_p, gamma_p, beta_p, w_out_p, b_out_p, row_mask)

    return out_p[:n, :out_dim]


def kaiming_uniform(key, out_features, in_features):
    # nn.init.kaiming_uniform_(w, nonlinearity='relu'):
    #   gain = sqrt(2), bound = gain * sqrt(3 / fan_in) = sqrt(6 / fan_in)
    bound = (6.0 / in_features) ** 0.5
    return jax.random.uniform(key, (out_features, in_features),
                              dtype=jnp.float32, minval=-bound, maxval=bound)


def reference_forward(x, w_in_t, w_h_t, gamma, beta, w_out_t, b_out,
                      matmul_dtype=jnp.float32):
    def mm(a, b):
        return jnp.dot(a.astype(matmul_dtype), b.astype(matmul_dtype),
                       preferred_element_type=jnp.float32)

    def bn_relu(h):
        mean = jnp.mean(h, axis=0, keepdims=True)
        var = jnp.mean((h - mean) ** 2, axis=0, keepdims=True)
        return jnp.maximum((h - mean) / jnp.sqrt(var + BN_EPS) * gamma + beta,
                           0.0)

    h = bn_relu(mm(x, w_in_t))
    for l in range(w_h_t.shape[0]):
        h = bn_relu(mm(h, w_h_t[l]))
    return mm(h, w_out_t) + b_out


if __name__ == "__main__":
    # Small, forward-consistent shapes.
    batch, input_dim, hidden, output_dim, num_layers = 8, 4, 32, 2, 1

    key = jax.random.PRNGKey(0)
    k_x, k_in, k_h, k_out = jax.random.split(key, 4)

    x = jax.random.normal(k_x, (batch, input_dim), dtype=jnp.float32)

    # Deterministic Kaiming-uniform init (matches the module's reset()).
    w_in = kaiming_uniform(k_in, hidden, input_dim)                 # (H, in)
    w_h = jnp.stack([kaiming_uniform(k, hidden, hidden)
                     for k in jax.random.split(k_h, num_layers)])   # (L, H, H)
    w_out = kaiming_uniform(k_out, output_dim, hidden)              # (out, H)
    # nn.Linear bias init is uniform(+-1/sqrt(fan_in)); use zeros deterministically.
    b_out = jnp.zeros((1, output_dim), dtype=jnp.float32)

    # BatchNorm1d default affine params.
    gamma = jnp.ones((1, hidden), dtype=jnp.float32)
    beta = jnp.zeros((1, hidden), dtype=jnp.float32)

    # Pre-transpose linear weights to (in, out) for the kernel.
    w_in_t = w_in.T
    w_h_t = jnp.transpose(w_h, (0, 2, 1))
    w_out_t = w_out.T

    out = mlp_bn_pre_forward(x, w_in_t, w_h_t, gamma, beta, w_out_t, b_out)
    out = jax.block_until_ready(out)
    assert out.shape == (batch, output_dim)

    # Reference that mirrors the kernel's bf16 MXU operands (tight check) ...
    ref_bf16 = reference_forward(x, w_in_t, w_h_t, gamma, beta, w_out_t, b_out,
                                 matmul_dtype=jnp.bfloat16)
    # ... and the pure-f32 module semantics (loose check; bf16 matmul precision).
    ref_f32 = reference_forward(x, w_in_t, w_h_t, gamma, beta, w_out_t, b_out,
                                matmul_dtype=jnp.float32)

    assert jnp.allclose(out, ref_bf16, atol=2e-2, rtol=2e-2), \
        "mismatch vs bf16-matmul reference"
    assert jnp.allclose(out, ref_f32, atol=2e-1, rtol=2e-1), \
        "mismatch vs f32 reference"

    print("KERNEL_OK")
</pallas_src>

<mosaic_0001>
module attributes {stable_mosaic.version = 11 : i64} {
  func.func @mlp_bn_pre_kernel(%arg0: i32, %arg1: memref<16x128xbf16, #tpu.memory_space<vmem>>, %arg2: memref<128x128xbf16, #tpu.memory_space<vmem>>, %arg3: memref<1x128x128xbf16, #tpu.memory_space<vmem>>, %arg4: memref<1x128xf32, #tpu.memory_space<vmem>>, %arg5: memref<1x128xf32, #tpu.memory_space<vmem>>, %arg6: memref<128x128xbf16, #tpu.memory_space<vmem>>, %arg7: memref<1x128xf32, #tpu.memory_space<vmem>>, %arg8: memref<16x1xf32, #tpu.memory_space<vmem>>, %arg9: memref<16x128xf32, #tpu.memory_space<vmem>>, %arg10: memref<16x128xf32, #tpu.memory_space<vmem>>) attributes {dimension_semantics = [#tpu.dimension_semantics<arbitrary>], iteration_bounds = array<i64: 2>, scalar_prefetch = 0 : i64, scratch_operands = 1 : i64, tpu.core_type = #tpu.core_type<tc>, window_params = [{pipeline_mode = #tpu.pipeline_mode<synchronous>, transform_indices = @transform_0, window_bounds = array<i64: 16, 128>}, {pipeline_mode = #tpu.pipeline_mode<synchronous>, transform_indices = @transform_1, window_bounds = array<i64: 128, 128>}, {transform_indices = @transform_2, window_bounds = array<i64: 1, 128, 128>}, {pipeline_mode = #tpu.pipeline_mode<synchronous>, transform_indices = @transform_3, window_bounds = array<i64: 1, 128>}, {pipeline_mode = #tpu.pipeline_mode<synchronous>, transform_indices = @transform_4, window_bounds = array<i64: 1, 128>}, {pipeline_mode = #tpu.pipeline_mode<synchronous>, transform_indices = @transform_5, window_bounds = array<i64: 128, 128>}, {pipeline_mode = #tpu.pipeline_mode<synchronous>, transform_indices = @transform_6, window_bounds = array<i64: 1, 128>}, {pipeline_mode = #tpu.pipeline_mode<synchronous>, transform_indices = @transform_7, window_bounds = array<i64: 16, 1>}, {pipeline_mode = #tpu.pipeline_mode<synchronous>, transform_indices = @transform_8, window_bounds = array<i64: 16, 128>}]} {
    %c0 = arith.constant 0 : index
    %c0_0 = arith.constant 0 : index
    %0 = vector.load %arg4[%c0, %c0_0] : memref<1x128xf32, #tpu.memory_space<vmem>>, vector<1x128xf32>
    %c0_1 = arith.constant 0 : index
    %c0_2 = arith.constant 0 : index
    %1 = vector.load %arg5[%c0_1, %c0_2] : memref<1x128xf32, #tpu.memory_space<vmem>>, vector<1x128xf32>
    %c0_3 = arith.constant 0 : index
    %c0_4 = arith.constant 0 : index
    %2 = vector.load %arg8[%c0_3, %c0_4] : memref<16x1xf32, #tpu.memory_space<vmem>>, vector<16x1xf32>
    %c0_i32 = arith.constant 0 : i32
    %3 = arith.cmpi eq, %arg0, %c0_i32 : i32
    %4 = arith.extui %3 : i1 to i32
    %cst = arith.constant 1.250000e-01 : f32
    %c0_i32_5 = arith.constant 0 : i32
    %5 = arith.cmpi ne, %4, %c0_i32_5 : i32
    scf.if %5 {
      %c0_10 = arith.constant 0 : index
      %c0_11 = arith.constant 0 : index
      %12 = vector.load %arg1[%c0_10, %c0_11] : memref<16x128xbf16, #tpu.memory_space<vmem>>, vector<16x128xbf16>
      %c0_12 = arith.constant 0 : index
      %c0_13 = arith.constant 0 : index
      %13 = vector.load %arg2[%c0_12, %c0_13] : memref<128x128xbf16, #tpu.memory_space<vmem>>, vector<128x128xbf16>
      %cst_14 = arith.constant dense<0.000000e+00> : vector<16x128xf32>
      %14 = tpu.matmul %12, %13, %cst_14 {dimension_numbers = #tpu.dot_dimension_numbers<[1], [0], [0], [1], [0, 0, 1, 1], [], []>} : vector<16x128xbf16>, vector<128x128xbf16>, vector<16x128xf32> -> vector<16x128xf32>
      %cst_15 = arith.constant dense<0.000000e+00> : vector<128xf32>
      %15 = vector.multi_reduction <add>, %14, %cst_15 [0] : vector<16x128xf32> to vector<128xf32>
      %16 = vector.shape_cast %15 : vector<128xf32> to vector<1x128xf32>
      %17 = arith.mulf %14, %14 : vector<16x128xf32>
      %cst_16 = arith.constant dense<0.000000e+00> : vector<128xf32>
      %18 = vector.multi_reduction <add>, %17, %cst_16 [0] : vector<16x128xf32> to vector<128xf32>
      %19 = vector.shape_cast %18 : vector<128xf32> to vector<1x128xf32>
      %20 = vector.broadcast %cst : f32 to vector<1x128xf32>
      %21 = arith.mulf %16, %20 : vector<1x128xf32>
      %22 = vector.broadcast %cst : f32 to vector<1x128xf32>
      %23 = arith.mulf %19, %22 : vector<1x128xf32>
      %24 = arith.mulf %21, %21 : vector<1x128xf32>
      %25 = arith.subf %23, %24 : vector<1x128xf32>
      %cst_17 = arith.constant 0.000000e+00 : f32
      %26 = vector.broadcast %cst_17 : f32 to vector<1x128xf32>
      %27 = arith.maximumf %25, %26 : vector<1x128xf32>
      %cst_18 = arith.constant 9.99999974E-6 : f32
      %28 = vector.broadcast %cst_18 : f32 to vector<1x128xf32>
      %29 = arith.addf %27, %28 : vector<1x128xf32>
      %30 = math.rsqrt %29 : vector<1x128xf32>
      %31 = arith.mulf %0, %30 : vector<1x128xf32>
      %32 = arith.mulf %21, %31 : vector<1x128xf32>
      %33 = arith.subf %1, %32 : vector<1x128xf32>
      %34 = vector.broadcast %31 : vector<1x128xf32> to vector<16x128xf32>
      %35 = arith.mulf %14, %34 : vector<16x128xf32>
      %36 = vector.broadcast %33 : vector<1x128xf32> to vector<16x128xf32>
      %37 = arith.addf %35, %36 : vector<16x128xf32>
      %cst_19 = arith.constant 0.000000e+00 : f32
      %38 = vector.broadcast %cst_19 : f32 to vector<16x128xf32>
      %39 = arith.maximumf %37, %38 : vector<16x128xf32>
      %40 = vector.broadcast %2 : vector<16x1xf32> to vector<16x128xf32>
      %41 = arith.mulf %39, %40 : vector<16x128xf32>
      %c0_20 = arith.constant 0 : index
      %c0_21 = arith.constant 0 : index
      %42 = vector.load %arg10[%c0_20, %c0_21] : memref<16x128xf32, #tpu.memory_space<vmem>>, vector<16x128xf32>
      tpu.vector_store %arg10[%c0_20, %c0_21], %41 {strides = array<i32>} : memref<16x128xf32, #tpu.memory_space<vmem>>, vector<16x128xf32>,
    } else {
    }
    %c0_i32_6 = arith.constant 0 : i32
    %6 = arith.cmpi sgt, %arg0, %c0_i32_6 : i32
    %7 = arith.extui %6 : i1 to i32
    %cst_7 = arith.constant 1.250000e-01 : f32
    %c0_i32_8 = arith.constant 0 : i32
    %8 = arith.cmpi ne, %7, %c0_i32_8 : i32
    scf.if %8 {
      %c0_10 = arith.constant 0 : index
      %c0_11 = arith.constant 0 : index
      %12 = vector.load %arg10[%c0_10, %c0_11] : memref<16x128xf32, #tpu.memory_space<vmem>>, vector<16x128xf32>
      %13 = arith.truncf %12 : vector<16x128xf32> to vector<16x128xbf16>
      %c0_12 = arith.constant 0 : index
      %c0_13 = arith.constant 0 : index
      %c0_14 = arith.constant 0 : index
      %14 = vector.load %arg3[%c0_12, %c0_13, %c0_14] : memref<1x128x128xbf16, #tpu.memory_space<vmem>>, vector<1x128x128xbf16>
      %15 = vector.shape_cast %14 : vector<1x128x128xbf16> to vector<128x128xbf16>
      %cst_15 = arith.constant dense<0.000000e+00> : vector<16x128xf32>
      %16 = tpu.matmul %13, %15, %cst_15 {dimension_numbers = #tpu.dot_dimension_numbers<[1], [0], [0], [1], [0, 0, 1, 1], [], []>} : vector<16x128xbf16>, vector<128x128xbf16>, vector<16x128xf32> -> vector<16x128xf32>
      %cst_16 = arith.constant dense<0.000000e+00> : vector<128xf32>
      %17 = vector.multi_reduction <add>, %16, %cst_16 [0] : vector<16x128xf32> to vector<128xf32>
      %18 = vector.shape_cast %17 : vector<128xf32> to vector<1x128xf32>
      %19 = arith.mulf %16, %16 : vector<16x128xf32>
      %cst_17 = arith.constant dense<0.000000e+00> : vector<128xf32>
      %20 = vector.multi_reduction <add>, %19, %cst_17 [0] : vector<16x128xf32> to vector<128xf32>
      %21 = vector.shape_cast %20 : vector<128xf32> to vector<1x128xf32>
      %22 = vector.broadcast %cst_7 : f32 to vector<1x128xf32>
      %23 = arith.mulf %18, %22 : vector<1x128xf32>
      %24 = vector.broadcast %cst_7 : f32 to vector<1x128xf32>
      %25 = arith.mulf %21, %24 : vector<1x128xf32>
      %26 = arith.mulf %23, %23 : vector<1x128xf32>
      %27 = arith.subf %25, %26 : vector<1x128xf32>
      %cst_18 = arith.constant 0.000000e+00 : f32
      %28 = vector.broadcast %cst_18 : f32 to vector<1x128xf32>
      %29 = arith.maximumf %27, %28 : vector<1x128xf32>
      %cst_19 = arith.constant 9.99999974E-6 : f32
      %30 = vector.broadcast %cst_19 : f32 to vector<1x128xf32>
      %31 = arith.addf %29, %30 : vector<1x128xf32>
      %32 = math.rsqrt %31 : vector<1x128xf32>
      %33 = arith.mulf %0, %32 : vector<1x128xf32>
      %34 = arith.mulf %23, %33 : vector<1x128xf32>
      %35 = arith.subf %1, %34 : vector<1x128xf32>
      %36 = vector.broadcast %33 : vector<1x128xf32> to vector<16x128xf32>
      %37 = arith.mulf %16, %36 : vector<16x128xf32>
      %38 = vector.broadcast %35 : vector<1x128xf32> to vector<16x128xf32>
      %39 = arith.addf %37, %38 : vector<16x128xf32>
      %cst_20 = arith.constant 0.000000e+00 : f32
      %40 = vector.broadcast %cst_20 : f32 to vector<16x128xf32>
      %41 = arith.maximumf %39, %40 : vector<16x128xf32>
      %42 = vector.broadcast %2 : vector<16x1xf32> to vector<16x128xf32>
      %43 = arith.mulf %41, %42 : vector<16x128xf32>
      %c0_21 = arith.constant 0 : index
      %c0_22 = arith.constant 0 : index
      %44 = vector.load %arg10[%c0_21, %c0_22] : memref<16x128xf32, #tpu.memory_space<vmem>>, vector<16x128xf32>
      tpu.vector_store %arg10[%c0_21, %c0_22], %43 {strides = array<i32>} : memref<16x128xf32, #tpu.memory_space<vmem>>, vector<16x128xf32>,
    } else {
    }
    %c1_i32 = arith.constant 1 : i32
    %9 = arith.cmpi eq, %arg0, %c1_i32 : i32
    %10 = arith.extui %9 : i1 to i32
    %c0_i32_9 = arith.constant 0 : i32
    %11 = arith.cmpi ne, %10, %c0_i32_9 : i32
    scf.if %11 {
      %c0_10 = arith.constant 0 : index
      %c0_11 = arith.constant 0 : index
      %12 = vector.load %arg10[%c0_10, %c0_11] : memref<16x128xf32, #tpu.memory_space<vmem>>, vector<16x128xf32>
      %13 = arith.truncf %12 : vector<16x128xf32> to vector<16x128xbf16>
      %c0_12 = arith.constant 0 : index
      %c0_13 = arith.constant 0 : index
      %14 = vector.load %arg6[%c0_12, %c0_13] : memref<128x128xbf16, #tpu.memory_space<vmem>>, vector<128x128xbf16>
      %cst_14 = arith.constant dense<0.000000e+00> : vector<16x128xf32>
      %15 = tpu.matmul %13, %14, %cst_14 {dimension_numbers = #tpu.dot_dimension_numbers<[1], [0], [0], [1], [0, 0, 1, 1], [], []>} : vector<16x128xbf16>, vector<128x128xbf16>, vector<16x128xf32> -> vector<16x128xf32>
      %c0_15 = arith.constant 0 : index
      %c0_16 = arith.constant 0 : index
      %16 = vector.load %arg7[%c0_15, %c0_16] : memref<1x128xf32, #tpu.memory_space<vmem>>, vector<1x128xf32>
      %17 = vector.broadcast %16 : vector<1x128xf32> to vector<16x128xf32>
      %18 = arith.addf %15, %17 : vector<16x128xf32>
      %c0_17 = arith.constant 0 : index
      %c0_18 = arith.constant 0 : index
      %19 = vector.load %arg9[%c0_17, %c0_18] : memref<16x128xf32, #tpu.memory_space<vmem>>, vector<16x128xf32>
      tpu.vector_store %arg9[%c0_17, %c0_18], %18 {strides = array<i32>} : memref<16x128xf32, #tpu.memory_space<vmem>>, vector<16x128xf32>,
    } else {
    }
    return
  }
  func.func @transform_0(%arg0: i32) -> (i32, i32) {
    %c0_i32 = arith.constant 0 : i32
    %c0_i32_0 = arith.constant 0 : i32
    %c0_i32_1 = arith.constant 0 : i32
    return %c0_i32, %c0_i32_0 : i32, i32
  }
  func.func @transform_1(%arg0: i32) -> (i32, i32) {
    %c0_i32 = arith.constant 0 : i32
    %c0_i32_0 = arith.constant 0 : i32
    %c0_i32_1 = arith.constant 0 : i32
    return %c0_i32, %c0_i32_0 : i32, i32
  }
  func.func @transform_2(%arg0: i32) -> (i32, i32, i32) {
    %c1_i32 = arith.constant 1 : i32
    %0 = arith.subi %arg0, %c1_i32 : i32
    %c0_i32 = arith.constant 0 : i32
    %1 = arith.maxsi %0, %c0_i32 : i32
    %c0_i32_0 = arith.constant 0 : i32
    %c0_i32_1 = arith.constant 0 : i32
    %c0_i32_2 = arith.constant 0 : i32
    return %1, %c0_i32_0, %c0_i32_1 : i32, i32, i32
  }
  func.func @transform_3(%arg0: i32) -> (i32, i32) {
    %c0_i32 = arith.constant 0 : i32
    %c0_i32_0 = arith.constant 0 : i32
    %c0_i32_1 = arith.constant 0 : i32
    return %c0_i32, %c0_i32_0 : i32, i32
  }
  func.func @transform_4(%arg0: i32) -> (i32, i32) {
    %c0_i32 = arith.constant 0 : i32
    %c0_i32_0 = arith.constant 0 : i32
    %c0_i32_1 = arith.constant 0 : i32
    return %c0_i32, %c0_i32_0 : i32, i32
  }
  func.func @transform_5(%arg0: i32) -> (i32, i32) {
    %c0_i32 = arith.constant 0 : i32
    %c0_i32_0 = arith.constant 0 : i32
    %c0_i32_1 = arith.constant 0 : i32
    return %c0_i32, %c0_i32_0 : i32, i32
  }
  func.func @transform_6(%arg0: i32) -> (i32, i32) {
    %c0_i32 = arith.constant 0 : i32
    %c0_i32_0 = arith.constant 0 : i32
    %c0_i32_1 = arith.constant 0 : i32
    return %c0_i32, %c0_i32_0 : i32, i32
  }
  func.func @transform_7(%arg0: i32) -> (i32, i32) {
    %c0_i32 = arith.constant 0 : i32
    %c0_i32_0 = arith.constant 0 : i32
    %c0_i32_1 = arith.constant 0 : i32
    return %c0_i32, %c0_i32_0 : i32, i32
  }
  func.func @transform_8(%arg0: i32) -> (i32, i32) {
    %c0_i32 = arith.constant 0 : i32
    %c0_i32_0 = arith.constant 0 : i32
    %c0_i32_1 = arith.constant 0 : i32
    return %c0_i32, %c0_i32_0 : i32, i32
  }
}

</mosaic_0001>

<llo_original>
// kernel: tpu_custom_call.1
$region0: #{tpu_custom_call.1}
  #allocation0 [shape = 'u32[]', space=smem, size = 0x4, offset = 0x4, fixed_abs, tag = 'smem constant byte address 0x4 - core index']
  #allocation1 [shape = 'u32[144,128]{1,0:T(1,128)}', space=vmem, size = 0x12000, scoped, tag = 'internal scratch']
  #allocation2 [shape = 'f32[16,128]{1,0:T(8,128)}', space=vmem, size = 0x2000, scoped, tag = 'scratch operand']
  %s0 = inlined_call_operand.vmem [shape: bf16[16,128], index: 0, kind: input, shape index: {}]
  %s1 = inlined_call_operand.hbm [shape: bf16[128,128], index: 1, kind: input, shape index: {}]
  %s2 = inlined_call_operand.hbm [shape: bf16[1,128,128], index: 2, kind: input, shape index: {}]
  %s3 = inlined_call_operand.vmem [shape: f32[1,128], index: 3, kind: input, shape index: {}]
  %s4 = inlined_call_operand.vmem [shape: f32[1,128], index: 4, kind: input, shape index: {}]
  %s5 = inlined_call_operand.hbm [shape: bf16[128,128], index: 5, kind: input, shape index: {}]
  %s6 = inlined_call_operand.vmem [shape: f32[1,128], index: 6, kind: input, shape index: {}]
  %s7 = inlined_call_operand.vmem [shape: f32[16,1], index: 7, kind: input, shape index: {}]
  %s8 = inlined_call_operand.hbm [shape: f32[16,128], index: 8, kind: output, shape index: {}]
  %s9 = sld [smem:[#allocation0]]
  $region89: #{tpu_custom_call.1} parent=0
    _
  %s11 = ssub.s32 1, %s9
  %s12 = scalar_select 0, %s11, %s9
  $region1: #{tpu_custom_call.1} parent=0
    #allocation3 [shape = 'u8[32768]{0}', space=vmem, size = 0x8000, scoped, tag = 'input window, operand 1, single buffered']
    #allocation4 [shape = 's32[2]{0}', space=sflag, size = 0x8, scoped, tag = 'scoped memory for tpu_custom_call.1']
    #allocation5 [shape = 's32[2]{0}', space=sflag, size = 0x8, scoped, tag = 'scoped memory for tpu_custom_call.1']
    #allocation6 [shape = 'u8[65536]{0}', space=vmem, size = 0x10000, scoped, tag = 'input window, operand 2']
    #allocation7 [shape = 's32[2]{0}', space=sflag, size = 0x8, scoped, tag = 'scoped memory for tpu_custom_call.1']
    #allocation8 [shape = 'u8[32768]{0}', space=vmem, size = 0x8000, scoped, tag = 'input window, operand 5, single buffered']
    #allocation9 [shape = 'u8[8192]{0}', space=vmem, size = 0x2000, scoped, tag = 'output window, operand 0, single buffered']
    %13 = vsyncpa [#allocation4], 0
    %14 = vsyncpa [#allocation7], 0
    %s15 = scalar_lea.sflag [#allocation7], 1
    %16 = vsyncpa %s15, 0
    %17 = vsyncpa [#allocation5], 0
    loop: start=0, step=1, limit=4
    $region2: #{tpu_custom_call.1} parent=1 // loop_pre_header
      _
    $region3: #{tpu_custom_call.1} parent=1 // loop_header
      %s19 = sphi 0, %s23
      %p20 = scmp.ge.s32.totalorder %s19, 4
      %s27 = sphi 0, %s27
      %s29 = sphi 0, %s27
      %s30 = sphi 0, %s29
      %s44 = sphi 0, %s30
      %s48 = sphi 0, %s48
      %s50 = sphi 0, %s48
      %s51 = sphi 0, %s50
      %s65 = sphi 0, %s51
      %s77 = sphi 0, %s79
      %s80 = sphi 0, %s77
      %s81 = sphi 0, %s80
      %s97 = sphi 0, %s81
      %s101 = sphi 0, %s101
      %s103 = sphi 0, %s101
      %s104 = sphi 0, %s103
      %s118 = sphi 0, %s104
      %s122 = sphi 0, %s122
      %s124 = sphi 0, %s122
      %s125 = sphi 0, %s124
      %s139 = sphi 0, %s125
      %s143 = sphi 0, %s143
      %s145 = sphi 0, %s143
      %s146 = sphi 0, %s145
      %s160 = sphi 0, %s146
      %s164 = sphi 0, %s164
      %s166 = sphi 0, %s164
      %s167 = sphi 0, %s166
      %s181 = sphi 0, %s167
      %s185 = sphi 0, %s185
      %s187 = sphi 0, %s185
      %s188 = sphi 0, %s187
      %s202 = sphi 0, %s188
      %s206 = sphi 0, %s206
      %s208 = sphi 0, %s206
      %s209 = sphi 0, %s208
      %s223 = sphi 0, %s209
    $region4: #{tpu_custom_call.1} parent=1 // loop_header_branch
      %22 = sbr.rel (%p20) target = $region8
    $region5: #{tpu_custom_call.1} parent=1 // loop_body
      %s24 = ssub.s32 %s19, 1
      %s25 = ssub.s32 %s19, 2
      %s26 = sadd.s32 %s19, 1
      %s28 = sadd.s32 %s27, 1
      %p31 = scmp.eq.s32.totalorder %s19, 1
      %p32 = scmp.ne.s32.totalorder %s27, %s29
      %p33 = scmp.eq.s32.totalorder %s19, 0
      %p34 = por %p32, %p33
      %p35 = scmp.ne.s32.totalorder %s27, %s29
      %p36 = scmp.eq.s32.totalorder %s24, 1
      %p37 = por %p35, %p36
      %p38 = scmp.ne.s32.totalorder %s29, %s30
      %p39 = scmp.eq.s32.totalorder %s24, 0
      %p40 = por %p38, %p39
      %p41 = scmp.ne.s32.totalorder %s29, %s30
      %p42 = scmp.eq.s32.totalorder %s25, 1
      %p43 = por %p41, %p42
      %p45 = scmp.ne.s32.totalorder %s30, %s44
      %p46 = scmp.eq.s32.totalorder %s25, 0
      %p47 = por %p45, %p46
      %s49 = sadd.s32 %s48, 1
      %p52 = scmp.eq.s32.totalorder %s19, 1
      %p53 = scmp.ne.s32.totalorder %s48, %s50
      %p54 = scmp.eq.s32.totalorder %s19, 0
      %p55 = por %p53, %p54
      %p56 = scmp.ne.s32.totalorder %s48, %s50
      %p57 = scmp.eq.s32.totalorder %s24, 1
      %p58 = por %p56, %p57
      %p59 = scmp.ne.s32.totalorder %s50, %s51
      %p60 = scmp.eq.s32.totalorder %s24, 0
      %p61 = por %p59, %p60
      %p62 = scmp.ne.s32.totalorder %s50, %s51
      %p63 = scmp.eq.s32.totalorder %s25, 1
      %p64 = por %p62, %p63
      %p66 = scmp.ne.s32.totalorder %s51, %s65
      %p67 = scmp.eq.s32.totalorder %s25, 0
      %p68 = por %p66, %p67
      %s69 = ssub.s32 %s19, 1
      %p70 = scmp.gt.s32.totalorder %s69, 0
      %s71 = scalar_select %p70, %s69, 0
      %s72 = ssub.s32 %s26, 1
      %p73 = scmp.gt.s32.totalorder %s72, 0
      %s74 = scalar_select %p73, %s72, 0
      %s75 = ssub.s32 %s71, %s74
      %p76 = scmp.eq.s32.totalorder %s75, 0
      %s78 = sadd.s32 %s77, 1
      %s79 = scalar_select %p76, %s77, %s78
      %p82 = pneg %p76
      %p83 = scmp.eq.s32.totalorder %s19, 1
      %p84 = por %p82, %p83
      %p85 = scmp.ne.s32.totalorder %s77, %s80
      %p86 = scmp.eq.s32.totalorder %s19, 0
      %p87 = por %p85, %p86
      %p88 = scmp.ne.s32.totalorder %s77, %s80
      %p89 = scmp.eq.s32.totalorder %s24, 1
      %p90 = por %p88, %p89
      %p91 = scmp.ne.s32.totalorder %s80, %s81
      %p92 = scmp.eq.s32.totalorder %s24, 0
      %p93 = por %p91, %p92
      %p94 = scmp.ne.s32.totalorder %s80, %s81
      %p95 = scmp.eq.s32.totalorder %s25, 1
      %p96 = por %p94, %p95
      %p98 = scmp.ne.s32.totalorder %s81, %s97
      %p99 = scmp.eq.s32.totalorder %s25, 0
      %p100 = por %p98, %p99
      %s102 = sadd.s32 %s101, 1
      %p105 = scmp.eq.s32.totalorder %s19, 1
      %p106 = scmp.ne.s32.totalorder %s101, %s103
      %p107 = scmp.eq.s32.totalorder %s19, 0
      %p108 = por %p106, %p107
      %p109 = scmp.ne.s32.totalorder %s101, %s103
      %p110 = scmp.eq.s32.totalorder %s24, 1
      %p111 = por %p109, %p110
      %p112 = scmp.ne.s32.totalorder %s103, %s104
      %p113 = scmp.eq.s32.totalorder %s24, 0
      %p114 = por %p112, %p113
      %p115 = scmp.ne.s32.totalorder %s103, %s104
      %p116 = scmp.eq.s32.totalorder %s25, 1
      %p117 = por %p115, %p116
      %p119 = scmp.ne.s32.totalorder %s104, %s118
      %p120 = scmp.eq.s32.totalorder %s25, 0
      %p121 = por %p119, %p120
      %s123 = sadd.s32 %s122, 1
      %p126 = scmp.eq.s32.totalorder %s19, 1
      %p127 = scmp.ne.s32.totalorder %s122, %s124
      %p128 = scmp.eq.s32.totalorder %s19, 0
      %p129 = por %p127, %p128
      %p130 = scmp.ne.s32.totalorder %s122, %s124
      %p131 = scmp.eq.s32.totalorder %s24, 1
      %p132 = por %p130, %p131
      %p133 = scmp.ne.s32.totalorder %s124, %s125
      %p134 = scmp.eq.s32.totalorder %s24, 0
      %p135 = por %p133, %p134
      %p136 = scmp.ne.s32.totalorder %s124, %s125
      %p137 = scmp.eq.s32.totalorder %s25, 1
      %p138 = por %p136, %p137
      %p140 = scmp.ne.s32.totalorder %s125, %s139
      %p141 = scmp.eq.s32.totalorder %s25, 0
      %p142 = por %p140, %p141
      %s144 = sadd.s32 %s143, 1
      %p147 = scmp.eq.s32.totalorder %s19, 1
      %p148 = scmp.ne.s32.totalorder %s143, %s145
      %p149 = scmp.eq.s32.totalorder %s19, 0
      %p150 = por %p148, %p149
      %p151 = scmp.ne.s32.totalorder %s143, %s145
      %p152 = scmp.eq.s32.totalorder %s24, 1
      %p153 = por %p151, %p152
      %p154 = scmp.ne.s32.totalorder %s145, %s146
      %p155 = scmp.eq.s32.totalorder %s24, 0
      %p156 = por %p154, %p155
      %p157 = scmp.ne.s32.totalorder %s145, %s146
      %p158 = scmp.eq.s32.totalorder %s25, 1
      %p159 = por %p157, %p158
      %p161 = scmp.ne.s32.totalorder %s146, %s160
      %p162 = scmp.eq.s32.totalorder %s25, 0
      %p163 = por %p161, %p162
      %s165 = sadd.s32 %s164, 1
      %p168 = scmp.eq.s32.totalorder %s19, 1
      %p169 = scmp.ne.s32.totalorder %s164, %s166
      %p170 = scmp.eq.s32.totalorder %s19, 0
      %p171 = por %p169, %p170
      %p172 = scmp.ne.s32.totalorder %s164, %s166
      %p173 = scmp.eq.s32.totalorder %s24, 1
      %p174 = por %p172, %p173
      %p175 = scmp.ne.s32.totalorder %s166, %s167
      %p176 = scmp.eq.s32.totalorder %s24, 0
      %p177 = por %p175, %p176
      %p178 = scmp.ne.s32.totalorder %s166, %s167
      %p179 = scmp.eq.s32.totalorder %s25, 1
      %p180 = por %p178, %p179
      %p182 = scmp.ne.s32.totalorder %s167, %s181
      %p183 = scmp.eq.s32.totalorder %s25, 0
      %p184 = por %p182, %p183
      %s186 = sadd.s32 %s185, 1
      %p189 = scmp.eq.s32.totalorder %s19, 1
      %p190 = scmp.ne.s32.totalorder %s185, %s187
      %p191 = scmp.eq.s32.totalorder %s19, 0
      %p192 = por %p190, %p191
      %p193 = scmp.ne.s32.totalorder %s185, %s187
      %p194 = scmp.eq.s32.totalorder %s24, 1
      %p195 = por %p193, %p194
      %p196 = scmp.ne.s32.totalorder %s187, %s188
      %p197 = scmp.eq.s32.totalorder %s24, 0
      %p198 = por %p196, %p197
      %p199 = scmp.ne.s32.totalorder %s187, %s188
      %p200 = scmp.eq.s32.totalorder %s25, 1
      %p201 = por %p199, %p200
      %p203 = scmp.ne.s32.totalorder %s188, %s202
      %p204 = scmp.eq.s32.totalorder %s25, 0
      %p205 = por %p203, %p204
      %s207 = sadd.s32 %s206, 1
      %p210 = scmp.eq.s32.totalorder %s19, 1
      %p211 = scmp.ne.s32.totalorder %s206, %s208
      %p212 = scmp.eq.s32.totalorder %s19, 0
      %p213 = por %p211, %p212
      %p214 = scmp.ne.s32.totalorder %s206, %s208
      %p215 = scmp.eq.s32.totalorder %s24, 1
      %p216 = por %p214, %p215
      %p217 = scmp.ne.s32.totalorder %s208, %s209
      %p218 = scmp.eq.s32.totalorder %s24, 0
      %p219 = por %p217, %p218
      %p220 = scmp.ne.s32.totalorder %s208, %s209
      %p221 = scmp.eq.s32.totalorder %s25, 1
      %p222 = por %p220, %p221
      %p224 = scmp.ne.s32.totalorder %s209, %s223
      %p225 = scmp.eq.s32.totalorder %s25, 0
      %p226 = por %p224, %p225
      %p227 = scmp.le.s32.totalorder 1, %s19
      %p228 = scmp.lt.s32.totalorder %s19, 3
      %p229 = pnand %p227, %p228
      %p230 = pneg %p229
      // Predicated region
      $region9: #{tpu_custom_call.1} parent=5 // pred_check
        _
      $region10: #{tpu_custom_call.1} parent=5 // pred_check_branch
        %232 = sbr.rel (%p229) target = $region12
      $region11: #{tpu_custom_call.1} parent=5 // pred_region
        %s233 = ssub.s32 %s19, 1
        // Predicated region
        $region13: #{tpu_custom_call.1} parent=11 // pred_check
          %p234 = pneg %p40
        $region14: #{tpu_custom_call.1} parent=11 // pred_check_branch
          %236 = sbr.rel (%p234) target = $region16
        $region15: #{tpu_custom_call.1} parent=11 // pred_region
          _
        $region16: #{tpu_custom_call.1} parent=11 // pred_fallthru
          _
        // Predicated region
        $region17: #{tpu_custom_call.1} parent=11 // pred_check
          %p237 = pneg %p61
        $region18: #{tpu_custom_call.1} parent=11 // pred_check_branch
          %239 = sbr.rel (%p237) target = $region20
        $region19: #{tpu_custom_call.1} parent=11 // pred_region
          %s241 = ssub.s32 1024, 1024
          %242 = vsyncadd [#allocation4], %s241
          %s243 = sshll.u32 [#allocation3], 4
          %s244 = int_to_ptr.vmem [resolvable:$true] %s243
          %249 = dma.hbm_to_vmem [thread:$0]  %s1, 1024, %s244, [#allocation4], 64, 64, 4
        $region20: #{tpu_custom_call.1} parent=11 // pred_fallthru
          _
        // Predicated region
        $region21: #{tpu_custom_call.1} parent=11 // pred_check
          %p250 = pneg %p114
        $region22: #{tpu_custom_call.1} parent=11 // pred_check_branch
          %252 = sbr.rel (%p250) target = $region24
        $region23: #{tpu_custom_call.1} parent=11 // pred_region
          _
        $region24: #{tpu_custom_call.1} parent=11 // pred_fallthru
          _
        // Predicated region
        $region25: #{tpu_custom_call.1} parent=11 // pred_check
          %p253 = pneg %p135
        $region26: #{tpu_custom_call.1} parent=11 // pred_check_branch
          %255 = sbr.rel (%p253) target = $region28
        $region27: #{tpu_custom_call.1} parent=11 // pred_region
          _
        $region28: #{tpu_custom_call.1} parent=11 // pred_fallthru
          _
        // Predicated region
        $region29: #{tpu_custom_call.1} parent=11 // pred_check
          %p256 = pneg %p156
        $region30: #{tpu_custom_call.1} parent=11 // pred_check_branch
          %258 = sbr.rel (%p256) target = $region32
        $region31: #{tpu_custom_call.1} parent=11 // pred_region
          %s260 = ssub.s32 1024, 1024
          %261 = vsyncadd [#allocation7], %s260
          %s262 = sshll.u32 [#allocation8], 4
          %s263 = int_to_ptr.vmem [resolvable:$true] %s262
          %268 = dma.hbm_to_vmem [thread:$0]  %s5, 1024, %s263, [#allocation7], 64, 64, 4
        $region32: #{tpu_custom_call.1} parent=11 // pred_fallthru
          _
        // Predicated region
        $region33: #{tpu_custom_call.1} parent=11 // pred_check
          %p269 = pneg %p177
        $region34: #{tpu_custom_call.1} parent=11 // pred_check_branch
          %271 = sbr.rel (%p269) target = $region36
        $region35: #{tpu_custom_call.1} parent=11 // pred_region
          _
        $region36: #{tpu_custom_call.1} parent=11 // pred_fallthru
          _
        // Predicated region
        $region37: #{tpu_custom_call.1} parent=11 // pred_check
          %p272 = pneg %p198
        $region38: #{tpu_custom_call.1} parent=11 // pred_check_branch
          %274 = sbr.rel (%p272) target = $region40
        $region39: #{tpu_custom_call.1} parent=11 // pred_region
          _
        $region40: #{tpu_custom_call.1} parent=11 // pred_fallthru
          _
      $region12: #{tpu_custom_call.1} parent=5 // pred_fallthru
        _
      %p275 = scmp.lt.s32.totalorder %s19, 2
      // Predicated region
      $region41: #{tpu_custom_call.1} parent=5 // pred_check
        %p276 = pneg %p275
      $region42: #{tpu_custom_call.1} parent=5 // pred_check_branch
        %278 = sbr.rel (%p276) target = $region44
      $region43: #{tpu_custom_call.1} parent=5 // pred_region
        // Predicated region
        $region45: #{tpu_custom_call.1} parent=43 // pred_check
          %p279 = pneg %p87
        $region46: #{tpu_custom_call.1} parent=43 // pred_check_branch
          %281 = sbr.rel (%p279) target = $region48
        $region47: #{tpu_custom_call.1} parent=43 // pred_region
          %s282 = sand.u32 %s19, 1
          %s283 = scalar_lea.sflag [#allocation7], %s282
          %s284 = sand.u32 %s77, 1
          %s285 = smul.addr %s284, 64
          %s286 = scalar_lea.vmem [#allocation6], %s285
          %s287 = ssub.s32 %s19, 1
          %p288 = scmp.gt.s32.totalorder %s287, 0
          %s289 = scalar_select %p288, %s287, 0
          %s291 = ssub.s32 1024, 1024
          %292 = vsyncadd %s283, %s291
          %s293 = smul.addr %s289, 16
          %s294 = smul.addr %s293, 64
          %s295 = scalar_lea.hbm %s2, %s294
          %s296 = sshll.u32 %s286, 4
          %s297 = int_to_ptr.vmem [resolvable:$true] %s296
          %302 = dma.hbm_to_vmem [thread:$0]  %s295, 1024, %s297, %s283, 64, 64, 4
        $region48: #{tpu_custom_call.1} parent=43 // pred_fallthru
          _
      $region44: #{tpu_custom_call.1} parent=5 // pred_fallthru
        _
      %p303 = scmp.le.s32.totalorder 1, %s19
      %p304 = scmp.lt.s32.totalorder %s19, 3
      %p305 = pnand %p303, %p304
      %p306 = pneg %p305
      // Predicated region
      $region49: #{tpu_custom_call.1} parent=5 // pred_check
        _
      $region50: #{tpu_custom_call.1} parent=5 // pred_check_branch
        %308 = sbr.rel (%p305) target = $region52
      $region51: #{tpu_custom_call.1} parent=5 // pred_region
        %s309 = ssub.s32 %s19, 1
        // Predicated region
        $region53: #{tpu_custom_call.1} parent=51 // pred_check
          %p310 = pneg %p61
        $region54: #{tpu_custom_call.1} parent=51 // pred_check_branch
          %312 = sbr.rel (%p310) target = $region56
        $region55: #{tpu_custom_call.1} parent=51 // pred_region
          %313 = dma.done [#allocation4], 1024
        $region56: #{tpu_custom_call.1} parent=51 // pred_fallthru
          _
        %s314 = sand.u32 %s24, 1
        %s315 = scalar_lea.sflag [#allocation7], %s314
        %s316 = sand.u32 %s80, 1
        %s317 = smul.addr %s316, 64
        %s318 = scalar_lea.vmem [#allocation6], %s317
        // Predicated region
        $region57: #{tpu_custom_call.1} parent=51 // pred_check
          %p319 = pneg %p93
        $region58: #{tpu_custom_call.1} parent=51 // pred_check_branch
          %321 = sbr.rel (%p319) target = $region60
        $region59: #{tpu_custom_call.1} parent=51 // pred_region
          %322 = dma.done %s315, 1024
        $region60: #{tpu_custom_call.1} parent=51 // pred_fallthru
          _
        // Predicated region
        $region61: #{tpu_custom_call.1} parent=51 // pred_check
          %p323 = pneg %p156
        $region62: #{tpu_custom_call.1} parent=51 // pred_check_branch
          %325 = sbr.rel (%p323) target = $region64
        $region63: #{tpu_custom_call.1} parent=51 // pred_region
          %326 = dma.done [#allocation7], 1024
        $region64: #{tpu_custom_call.1} parent=51 // pred_fallthru
          _
        %p327 = pneg %p40
        %p328 = pneg %p37
        %p329 = pneg %p61
        %p330 = pneg %p58
        %s331 = sand.u32 %s24, 1
        %s332 = scalar_lea.sflag [#allocation7], %s331
        %s333 = sand.u32 %s80, 1
        %s334 = smul.addr %s333, 64
        %s335 = scalar_lea.vmem [#allocation6], %s334
        %p336 = pneg %p93
        %p337 = pneg %p90
        %p338 = pneg %p114
        %p339 = pneg %p111
        %p340 = pneg %p135
        %p341 = pneg %p132
        %p342 = pneg %p156
        %p343 = pneg %p153
        %p344 = pneg %p177
        %p345 = pneg %p174
        %p346 = pneg %p198
        %p347 = pneg %p195
        %p348 = pneg %p219
        %p349 = pneg %p216
        %s350 = ssub.s32 %s24, 1
        %p351 = scmp.gt.s32.totalorder %s350, 0
        %s352 = scalar_select %p351, %s350, 0
        %v354 = vld [vmem:[%s3] sm:$0x1]
        %v355 = vld [vmem:[%s4] sm:$0x1]
        %v356 = vld [vmem:[%s7] sm:$0xff]
        %v357 = vld [vmem:[%s7 + $0x8] sm:$0xff]
        %p358 = scmp.eq.s32.totalorder %s24, 0
        // Predicated region
        $region65: #{tpu_custom_call.1} parent=51 // pred_check
          %p359 = pneg %p358
        $region66: #{tpu_custom_call.1} parent=51 // pred_check_branch
          %361 = sbr.rel (%p359) target = $region68
        $region67: #{tpu_custom_call.1} parent=51 // pred_region
          %v362 = vld [vmem:[%s0] sm:$0xf]
          %v363 = vld [vmem:[%s0 + $0x4] sm:$0xf]
          %v364 = vld [vmem:[#allocation3] sm:$0xf]
          %v365 = vld [vmem:[#allocation3 + $0x4] sm:$0xf]
          %v366 = vld [vmem:[#allocation3 + $0x8] sm:$0xf]
          %v367 = vld [vmem:[#allocation3 + $0xc] sm:$0xf]
          %v368 = vld [vmem:[#allocation3 + $0x10] sm:$0xf]
          %v369 = vld [vmem:[#allocation3 + $0x14] sm:$0xf]
          %v370 = vld [vmem:[#allocation3 + $0x18] sm:$0xf]
          %v371 = vld [vmem:[#allocation3 + $0x1c] sm:$0xf]
          %v372 = vld [vmem:[#allocation3 + $0x20] sm:$0xf]
          %v373 = vld [vmem:[#allocation3 + $0x24] sm:$0xf]
          %v374 = vld [vmem:[#allocation3 + $0x28] sm:$0xf]
          %v375 = vld [vmem:[#allocation3 + $0x2c] sm:$0xf]
          %v376 = vld [vmem:[#allocation3 + $0x30] sm:$0xf]
          %v377 = vld [vmem:[#allocation3 + $0x34] sm:$0xf]
          %v378 = vld [vmem:[#allocation3 + $0x38] sm:$0xf]
          %v379 = vld [vmem:[#allocation3 + $0x3c] sm:$0xf]
          %v382 = vunpack.c.l.b16 %v362
          %v383 = vunpack.c.l.b16 %v363
          %v384 = vpack.c.b16 %v383, %v382
          %v402 = vunpack.c.l.b16 %v364
          %v403 = vunpack.c.l.b16 %v365
          %v404 = vunpack.c.l.b16 %v366
          %v405 = vunpack.c.l.b16 %v367
          %v406 = vunpack.c.l.b16 %v368
          %v407 = vunpack.c.l.b16 %v369
          %v408 = vunpack.c.l.b16 %v370
          %v409 = vunpack.c.l.b16 %v371
          %v410 = vunpack.c.l.b16 %v372
          %v411 = vunpack.c.l.b16 %v373
          %v412 = vunpack.c.l.b16 %v374
          %v413 = vunpack.c.l.b16 %v375
          %v414 = vunpack.c.l.b16 %v376
          %v415 = vunpack.c.l.b16 %v377
          %v416 = vunpack.c.l.b16 %v378
          %v417 = vunpack.c.l.b16 %v379
          %v418 = vpack.c.b16 %v403, %v402
          %v419 = vpack.c.b16 %v405, %v404
          %v420 = vpack.c.b16 %v407, %v406
          %v421 = vpack.c.b16 %v409, %v408
          %v422 = vpack.c.b16 %v411, %v410
          %v423 = vpack.c.b16 %v413, %v412
          %v424 = vpack.c.b16 %v415, %v414
          %v425 = vpack.c.b16 %v417, %v416
          %434 = vmatprep.subr.bf16.mxu0 0
          %435 = vmatpush1.bf16.msra.mxu0 %v425
          %436 = vmatprep.subr.bf16.mxu0 0
          %437 = vmatpush1.bf16.msra.mxu0 %v424
          %438 = vmatprep.subr.bf16.mxu0 0
          %439 = vmatpush1.bf16.msra.mxu0 %v423
          %440 = vmatprep.subr.bf16.mxu0 0
          %441 = vmatpush1.bf16.msra.mxu0 %v422
          %442 = vmatprep.subr.bf16.mxu0 0
          %443 = vmatpush1.bf16.msra.mxu0 %v421
          %444 = vmatprep.subr.bf16.mxu0 0
          %445 = vmatpush1.bf16.msra.mxu0 %v420
          %446 = vmatprep.subr.bf16.mxu0 0
          %447 = vmatpush1.bf16.msra.mxu0 %v419
          %448 = vmatprep.subr.bf16.mxu0 0
          %449 = vmatpush1.bf16.msra.mxu0 %v418
          %450 = vmatprep.subr.bf16.mxu0 0
          %451 = vmatpush2.bf16.msra.mxu0 0
          %452 = vmatprep.subr.bf16.mxu0 0
          %453 = vmatpush2.bf16.msra.mxu0 0
          %454 = vmatprep.subr.bf16.mxu0 0
          %455 = vmatpush2.bf16.msra.mxu0 0
          %456 = vmatprep.subr.bf16.mxu0 0
          %457 = vmatpush2.bf16.msra.mxu0 0
          %458 = vmatprep.subr.bf16.mxu0 0
          %459 = vmatpush2.bf16.msra.mxu0 0
          %460 = vmatprep.subr.bf16.mxu0 0
          %461 = vmatpush2.bf16.msra.mxu0 0
          %462 = vmatprep.subr.bf16.mxu0 0
          %463 = vmatpush2.bf16.msra.mxu0 0
          %464 = vmatprep.subr.bf16.mxu0 0
          %465 = vmatpush2.bf16.msra.mxu0 0
          %466 = vmatprep.mubr.bf16.mxu0 0
          %467 = vmatmul.mubr.bf16.gmra.mxu0 %v384
          %v468 = vpop.f32.mrf.mxu0
          %v469 = vadd.f32 0.0, %v468
          %v470 = vpop.f32.mrf.mxu0
          %v471 = vpop.f32.mrf.mxu0
          %v472 = vadd.f32 0.0, %v471
          %v473 = vpop.f32.mrf.mxu0
          %474 = vdwg.mxu0
          %v475 = vadd.f32 %v469, %v472
          %v476 = vrot.slane %v475, 4
          %v477 = vadd.f32 %v475, %v476
          %v478 = vrot.slane %v477, 2
          %v479 = vadd.f32 %v477, %v478
          %v480 = vrot.slane %v479, 1
          %v481 = vadd.f32 %v479, %v480
          %v482 = vmul.f32 %v469, %v469
          %v483 = vmul.f32 %v472, %v472
          %v484 = vadd.f32 %v482, %v483
          %v485 = vrot.slane %v484, 4
          %v486 = vadd.f32 %v484, %v485
          %v487 = vrot.slane %v486, 2
          %v488 = vadd.f32 %v486, %v487
          %v489 = vrot.slane %v488, 1
          %v490 = vadd.f32 %v488, %v489
          %v491 = vmul.f32 %v481, 0.125
          %v492 = vmul.f32 %v490, 0.125
          %v493 = vmul.f32 %v491, %v491
          %v494 = vsub.f32 %v492, %v493
          %v495 = vmax.f32 %v494, 0.0
          %v496 = vadd.f32 %v495, 1e-05
          %v497 = vrsqrt.pop %v496
          %v498 = vmul.f32 %v354, %v497
          %v499 = vmul.f32 %v491, %v498
          %v500 = vsub.f32 %v355, %v499
          %v502 = vlaneseq
          %v503 = vshrl.u32 %v502, 7
          %v504 = vsub.s32 0, %v503
          %v505 = vrot.slane %v498, %v504
          %v507 = vmul.f32 %v469, %v505
          %v508 = vmul.f32 %v472, %v505
          %v510 = vlaneseq
          %v511 = vshrl.u32 %v510, 7
          %v512 = vsub.s32 0, %v511
          %v513 = vrot.slane %v500, %v512
          %v515 = vadd.f32 %v507, %v513
          %v516 = vadd.f32 %v508, %v513
          %v517 = vmax.f32 %v515, 0.0
          %v518 = vmax.f32 %v516, 0.0
          %520 = vset.pattern.permute.xlu0 0
          %521 = vperm.xlu0 %520, %v356
          %v522 = vpop.permute.xlu0 %521
          %525 = vset.pattern.permute.xlu0 0
          %526 = vperm.xlu0 %525, %v357
          %v527 = vpop.permute.xlu0 %526
          %v529 = vmul.f32 %v517, %v522
          %v530 = vmul.f32 %v518, %v527
          %531 = vst [vmem:[#allocation2] sm:$0xff] %v529
          %532 = vst [vmem:[#allocation2 + $0x8] sm:$0xff] %v530
        $region68: #{tpu_custom_call.1} parent=51 // pred_fallthru
          _
        %p533 = scmp.gt.s32.totalorder %s24, 0
        // Predicated region
        $region69: #{tpu_custom_call.1} parent=51 // pred_check
          %p534 = pneg %p533
        $region70: #{tpu_custom_call.1} parent=51 // pred_check_branch
          %536 = sbr.rel (%p534) target = $region72
        $region71: #{tpu_custom_call.1} parent=51 // pred_region
          %v537 = vld [vmem:[#allocation2] sm:$0xff]
          %v538 = vld [vmem:[#allocation2 + $0x8] sm:$0xff]
          %v539 = vpack.c.bf16 %v538, %v537
          %v540 = vld [vmem:[%s318] sm:$0xf]
          %v541 = vld [vmem:[%s318 + $0x4] sm:$0xf]
          %v542 = vld [vmem:[%s318 + $0x8] sm:$0xf]
          %v543 = vld [vmem:[%s318 + $0xc] sm:$0xf]
          %v544 = vld [vmem:[%s318 + $0x10] sm:$0xf]
          %v545 = vld [vmem:[%s318 + $0x14] sm:$0xf]
          %v546 = vld [vmem:[%s318 + $0x18] sm:$0xf]
          %v547 = vld [vmem:[%s318 + $0x1c] sm:$0xf]
          %v548 = vld [vmem:[%s318 + $0x20] sm:$0xf]
          %v549 = vld [vmem:[%s318 + $0x24] sm:$0xf]
          %v550 = vld [vmem:[%s318 + $0x28] sm:$0xf]
          %v551 = vld [vmem:[%s318 + $0x2c] sm:$0xf]
          %v552 = vld [vmem:[%s318 + $0x30] sm:$0xf]
          %v553 = vld [vmem:[%s318 + $0x34] sm:$0xf]
          %v554 = vld [vmem:[%s318 + $0x38] sm:$0xf]
          %v555 = vld [vmem:[%s318 + $0x3c] sm:$0xf]
          %v572 = vunpack.c.l.b16 %v540
          %v573 = vunpack.c.l.b16 %v541
          %v574 = vunpack.c.l.b16 %v542
          %v575 = vunpack.c.l.b16 %v543
          %v576 = vunpack.c.l.b16 %v544
          %v577 = vunpack.c.l.b16 %v545
          %v578 = vunpack.c.l.b16 %v546
          %v579 = vunpack.c.l.b16 %v547
          %v580 = vunpack.c.l.b16 %v548
          %v581 = vunpack.c.l.b16 %v549
          %v582 = vunpack.c.l.b16 %v550
          %v583 = vunpack.c.l.b16 %v551
          %v584 = vunpack.c.l.b16 %v552
          %v585 = vunpack.c.l.b16 %v553
          %v586 = vunpack.c.l.b16 %v554
          %v587 = vunpack.c.l.b16 %v555
          %v588 = vpack.c.b16 %v573, %v572
          %v589 = vpack.c.b16 %v575, %v574
          %v590 = vpack.c.b16 %v577, %v576
          %v591 = vpack.c.b16 %v579, %v578
          %v592 = vpack.c.b16 %v581, %v580
          %v593 = vpack.c.b16 %v583, %v582
          %v594 = vpack.c.b16 %v585, %v584
          %v595 = vpack.c.b16 %v587, %v586
          %604 = vmatprep.subr.bf16.mxu0 0
          %605 = vmatpush1.bf16.msra.mxu0 %v595
          %606 = vmatprep.subr.bf16.mxu0 0
          %607 = vmatpush1.bf16.msra.mxu0 %v594
          %608 = vmatprep.subr.bf16.mxu0 0
          %609 = vmatpush1.bf16.msra.mxu0 %v593
          %610 = vmatprep.subr.bf16.mxu0 0
          %611 = vmatpush1.bf16.msra.mxu0 %v592
          %612 = vmatprep.subr.bf16.mxu0 0
          %613 = vmatpush1.bf16.msra.mxu0 %v591
          %614 = vmatprep.subr.bf16.mxu0 0
          %615 = vmatpush1.bf16.msra.mxu0 %v590
          %616 = vmatprep.subr.bf16.mxu0 0
          %617 = vmatpush1.bf16.msra.mxu0 %v589
          %618 = vmatprep.subr.bf16.mxu0 0
          %619 = vmatpush1.bf16.msra.mxu0 %v588
          %620 = vmatprep.subr.bf16.mxu0 0
          %621 = vmatpush2.bf16.msra.mxu0 0
          %622 = vmatprep.subr.bf16.mxu0 0
          %623 = vmatpush2.bf16.msra.mxu0 0
          %624 = vmatprep.subr.bf16.mxu0 0
          %625 = vmatpush2.bf16.msra.mxu0 0
          %626 = vmatprep.subr.bf16.mxu0 0
          %627 = vmatpush2.bf16.msra.mxu0 0
          %628 = vmatprep.subr.bf16.mxu0 0
          %629 = vmatpush2.bf16.msra.mxu0 0
          %630 = vmatprep.subr.bf16.mxu0 0
          %631 = vmatpush2.bf16.msra.mxu0 0
          %632 = vmatprep.subr.bf16.mxu0 0
          %633 = vmatpush2.bf16.msra.mxu0 0
          %634 = vmatprep.subr.bf16.mxu0 0
          %635 = vmatpush2.bf16.msra.mxu0 0
          %636 = vmatprep.mubr.bf16.mxu0 0
          %637 = vmatmul.mubr.bf16.gmra.mxu0 %v539
          %v638 = vpop.f32.mrf.mxu0
          %v639 = vadd.f32 0.0, %v638
          %v640 = vpop.f32.mrf.mxu0
          %v641 = vpop.f32.mrf.mxu0
          %v642 = vadd.f32 0.0, %v641
          %v643 = vpop.f32.mrf.mxu0
          %644 = vdwg.mxu0
          %v645 = vadd.f32 %v639, %v642
          %v646 = vrot.slane %v645, 4
          %v647 = vadd.f32 %v645, %v646
          %v648 = vrot.slane %v647, 2
          %v649 = vadd.f32 %v647, %v648
          %v650 = vrot.slane %v649, 1
          %v651 = vadd.f32 %v649, %v650
          %v652 = vmul.f32 %v639, %v639
          %v653 = vmul.f32 %v642, %v642
          %v654 = vadd.f32 %v652, %v653
          %v655 = vrot.slane %v654, 4
          %v656 = vadd.f32 %v654, %v655
          %v657 = vrot.slane %v656, 2
          %v658 = vadd.f32 %v656, %v657
          %v659 = vrot.slane %v658, 1
          %v660 = vadd.f32 %v658, %v659
          %v661 = vmul.f32 %v651, 0.125
          %v662 = vmul.f32 %v660, 0.125
          %v663 = vmul.f32 %v661, %v661
          %v664 = vsub.f32 %v662, %v663
          %v665 = vmax.f32 %v664, 0.0
          %v666 = vadd.f32 %v665, 1e-05
          %v667 = vrsqrt.pop %v666
          %v668 = vmul.f32 %v354, %v667
          %v669 = vmul.f32 %v661, %v668
          %v670 = vsub.f32 %v355, %v669
          %v672 = vlaneseq
          %v673 = vshrl.u32 %v672, 7
          %v674 = vsub.s32 0, %v673
          %v675 = vrot.slane %v668, %v674
          %v677 = vmul.f32 %v639, %v675
          %v678 = vmul.f32 %v642, %v675
          %v680 = vlaneseq
          %v681 = vshrl.u32 %v680, 7
          %v682 = vsub.s32 0, %v681
          %v683 = vrot.slane %v670, %v682
          %v685 = vadd.f32 %v677, %v683
          %v686 = vadd.f32 %v678, %v683
          %v687 = vmax.f32 %v685, 0.0
          %v688 = vmax.f32 %v686, 0.0
          %690 = vset.pattern.permute.xlu0 0
          %691 = vperm.xlu0 %690, %v356
          %v692 = vpop.permute.xlu0 %691
          %695 = vset.pattern.permute.xlu0 0
          %696 = vperm.xlu0 %695, %v357
          %v697 = vpop.permute.xlu0 %696
          %v699 = vmul.f32 %v687, %v692
          %v700 = vmul.f32 %v688, %v697
          %701 = vst [vmem:[#allocation2] sm:$0xff] %v699
          %702 = vst [vmem:[#allocation2 + $0x8] sm:$0xff] %v700
        $region72: #{tpu_custom_call.1} parent=51 // pred_fallthru
          _
        %p703 = scmp.eq.s32.totalorder %s24, 1
        // Predicated region
        $region73: #{tpu_custom_call.1} parent=51 // pred_check
          %p704 = pneg %p703
        $region74: #{tpu_custom_call.1} parent=51 // pred_check_branch
          %706 = sbr.rel (%p704) target = $region76
        $region75: #{tpu_custom_call.1} parent=51 // pred_region
          %v707 = vld [vmem:[#allocation2] sm:$0xff]
          %v708 = vld [vmem:[#allocation2 + $0x8] sm:$0xff]
          %v709 = vpack.c.bf16 %v708, %v707
          %v710 = vld [vmem:[#allocation8] sm:$0xf]
          %v711 = vld [vmem:[#allocation8 + $0x4] sm:$0xf]
          %v712 = vld [vmem:[#allocation8 + $0x8] sm:$0xf]
          %v713 = vld [vmem:[#allocation8 + $0xc] sm:$0xf]
          %v714 = vld [vmem:[#allocation8 + $0x10] sm:$0xf]
          %v715 = vld [vmem:[#allocation8 + $0x14] sm:$0xf]
          %v716 = vld [vmem:[#allocation8 + $0x18] sm:$0xf]
          %v717 = vld [vmem:[#allocation8 + $0x1c] sm:$0xf]
          %v718 = vld [vmem:[#allocation8 + $0x20] sm:$0xf]
          %v719 = vld [vmem:[#allocation8 + $0x24] sm:$0xf]
          %v720 = vld [vmem:[#allocation8 + $0x28] sm:$0xf]
          %v721 = vld [vmem:[#allocation8 + $0x2c] sm:$0xf]
          %v722 = vld [vmem:[#allocation8 + $0x30] sm:$0xf]
          %v723 = vld [vmem:[#allocation8 + $0x34] sm:$0xf]
          %v724 = vld [vmem:[#allocation8 + $0x38] sm:$0xf]
          %v725 = vld [vmem:[#allocation8 + $0x3c] sm:$0xf]
          %v726 = vld [vmem:[%s6] sm:$0x1]
          %v728 = vlaneseq
          %v729 = vshrl.u32 %v728, 7
          %v730 = vsub.s32 0, %v729
          %v731 = vrot.slane %v726, %v730
          %v749 = vunpack.c.l.b16 %v710
          %v750 = vunpack.c.l.b16 %v711
          %v751 = vunpack.c.l.b16 %v712
          %v752 = vunpack.c.l.b16 %v713
          %v753 = vunpack.c.l.b16 %v714
          %v754 = vunpack.c.l.b16 %v715
          %v755 = vunpack.c.l.b16 %v716
          %v756 = vunpack.c.l.b16 %v717
          %v757 = vunpack.c.l.b16 %v718
          %v758 = vunpack.c.l.b16 %v719
          %v759 = vunpack.c.l.b16 %v720
          %v760 = vunpack.c.l.b16 %v721
          %v761 = vunpack.c.l.b16 %v722
          %v762 = vunpack.c.l.b16 %v723
          %v763 = vunpack.c.l.b16 %v724
          %v764 = vunpack.c.l.b16 %v725
          %v765 = vpack.c.b16 %v750, %v749
          %v766 = vpack.c.b16 %v752, %v751
          %v767 = vpack.c.b16 %v754, %v753
          %v768 = vpack.c.b16 %v756, %v755
          %v769 = vpack.c.b16 %v758, %v757
          %v770 = vpack.c.b16 %v760, %v759
          %v771 = vpack.c.b16 %v762, %v761
          %v772 = vpack.c.b16 %v764, %v763
          %781 = vmatprep.subr.bf16.mxu0 0
          %782 = vmatpush1.bf16.msra.mxu0 %v772
          %783 = vmatprep.subr.bf16.mxu0 0
          %784 = vmatpush1.bf16.msra.mxu0 %v771
          %785 = vmatprep.subr.bf16.mxu0 0
          %786 = vmatpush1.bf16.msra.mxu0 %v770
          %787 = vmatprep.subr.bf16.mxu0 0
          %788 = vmatpush1.bf16.msra.mxu0 %v769
          %789 = vmatprep.subr.bf16.mxu0 0
          %790 = vmatpush1.bf16.msra.mxu0 %v768
          %791 = vmatprep.subr.bf16.mxu0 0
          %792 = vmatpush1.bf16.msra.mxu0 %v767
          %793 = vmatprep.subr.bf16.mxu0 0
          %794 = vmatpush1.bf16.msra.mxu0 %v766
          %795 = vmatprep.subr.bf16.mxu0 0
          %796 = vmatpush1.bf16.msra.mxu0 %v765
          %797 = vmatprep.subr.bf16.mxu0 0
          %798 = vmatpush2.bf16.msra.mxu0 0
          %799 = vmatprep.subr.bf16.mxu0 0
          %800 = vmatpush2.bf16.msra.mxu0 0
          %801 = vmatprep.subr.bf16.mxu0 0
          %802 = vmatpush2.bf16.msra.mxu0 0
          %803 = vmatprep.subr.bf16.mxu0 0
          %804 = vmatpush2.bf16.msra.mxu0 0
          %805 = vmatprep.subr.bf16.mxu0 0
          %806 = vmatpush2.bf16.msra.mxu0 0
          %807 = vmatprep.subr.bf16.mxu0 0
          %808 = vmatpush2.bf16.msra.mxu0 0
          %809 = vmatprep.subr.bf16.mxu0 0
          %810 = vmatpush2.bf16.msra.mxu0 0
          %811 = vmatprep.subr.bf16.mxu0 0
          %812 = vmatpush2.bf16.msra.mxu0 0
          %813 = vmatprep.mubr.bf16.mxu0 0
          %814 = vmatmul.mubr.bf16.gmra.mxu0 %v709
          %v815 = vpop.f32.mrf.mxu0
          %v816 = vadd.f32 %v731, %v815
          %v817 = vpop.f32.mrf.mxu0
          %v818 = vpop.f32.mrf.mxu0
          %v819 = vadd.f32 %v731, %v818
          %v820 = vpop.f32.mrf.mxu0
          %821 = vdwg.mxu0
          %822 = vst [vmem:[#allocation9] sm:$0xff] %v816
          %823 = vst [vmem:[#allocation9 + $0x8] sm:$0xff] %v819
        $region76: #{tpu_custom_call.1} parent=51 // pred_fallthru
          _
        // Predicated region
        $region77: #{tpu_custom_call.1} parent=51 // pred_check
          %p824 = pneg %p216
        $region78: #{tpu_custom_call.1} parent=51 // pred_check_branch
          %826 = sbr.rel (%p824) target = $region80
        $region79: #{tpu_custom_call.1} parent=51 // pred_region
          %s828 = ssub.s32 256, 256
          %829 = vsyncadd [#allocation5], %s828
          %s830 = sshll.u32 [#allocation9], 4
          %s831 = int_to_ptr.vmem [resolvable:$true] %s830
          %836 = dma.vmem_to_hbm [thread:$0]  %s831, 256, %s8, [#allocation5], 128, 128, 8
        $region80: #{tpu_custom_call.1} parent=51 // pred_fallthru
          _
        // Predicated region
        $region81: #{tpu_custom_call.1} parent=51 // pred_check
          %p837 = pneg %p216
        $region82: #{tpu_custom_call.1} parent=51 // pred_check_branch
          %839 = sbr.rel (%p837) target = $region84
        $region83: #{tpu_custom_call.1} parent=51 // pred_region
          %840 = dma.done [#allocation5], 256
        $region84: #{tpu_custom_call.1} parent=51 // pred_fallthru
          _
      $region52: #{tpu_custom_call.1} parent=5 // pred_fallthru
        _
      %p841 = scmp.le.s32.totalorder 2, %s19
      // Predicated region
      $region85: #{tpu_custom_call.1} parent=5 // pred_check
        %p842 = pneg %p841
      $region86: #{tpu_custom_call.1} parent=5 // pred_check_branch
        %844 = sbr.rel (%p842) target = $region88
      $region87: #{tpu_custom_call.1} parent=5 // pred_region
        %s845 = ssub.s32 %s19, 2
      $region88: #{tpu_custom_call.1} parent=5 // pred_fallthru
        _
    $region6: #{tpu_custom_call.1} parent=1 // loop_footer
      %s23 = sadd.s32 1, %s19
    $region7: #{tpu_custom_call.1} parent=1 // loop_footer_branch
      %18 = sbr.rel target = $region3
    $region8: #{tpu_custom_call.1} parent=1 // loop_exit
      _
    %846 = vsyncpa [#allocation4], 1
    %s847 = scalar_lea.sflag [#allocation4], 1
    %848 = vsyncpa %s847, 1
    %849 = vsyncpa [#allocation7], 1
    %s850 = scalar_lea.sflag [#allocation7], 1
    %851 = vsyncpa %s850, 1
    %852 = vsyncpa [#allocation5], 1
    %s853 = scalar_lea.sflag [#allocation5], 1
    %854 = vsyncpa %s853, 1

</llo_original>
